<compile_context>
chip_gen: v7x
topology: tpu7x:2x2x1
jax: 0.10.0
libtpu: 0.0.40
codegen_flags: <defaults>
</compile_context>

<pallas_src>
import functools

import jax
import jax.numpy as jnp
from jax.experimental import pallas as pl
from jax.experimental.pallas import tpu as pltpu

_LANE = 128
_TILE_S_MAX = 64 * 1024                    # spatial columns; diminishing returns past this
_VMEM_STREAM_BUDGET = 40 * 1024 * 1024     # bytes for double-buffered streamed blocks (v7x-safe)


def _cdiv(a, b):
    return -(-a // b)


def _round_up(x, m):
    return _cdiv(x, m) * m


def _attention_kernel(g_ref, x_ref, wg_ref, wx_ref, bgx_ref, wpsi_ref, bpsi_ref,
                      out_ref, *, chunk):
    """One (batch, spatial-tile) block of the attention gate (channels-first).

    g_ref:    (F_l, TILE_S)    x_ref: (F_g, TILE_S)    out_ref: (F_g, TILE_S)
    wg_ref:   (F_int, F_l)     folded Conv+BN weights (input channels along last dim)
    wx_ref:   (F_int, F_g)
    bgx_ref:  (F_int, 1)       folded b_g + b_x
    wpsi_ref: (F_int, 1)       folded psi weights
    bpsi_ref: (1, 1)           folded psi bias
    """
    f_l = g_ref.shape[0]
    f_g = x_ref.shape[0]
    tile_s = x_ref.shape[1]
    n_chunks = tile_s // chunk

    # Tiny folded weights: load ONCE, hoisted out of the spatial-chunk loop.
    wg = wg_ref[...]         # (F_int, F_l)
    wx = wx_ref[...]         # (F_int, F_g)
    bgx = bgx_ref[...]       # (F_int, 1)
    wpsi = wpsi_ref[...]     # (F_int, 1)
    bpsi = bpsi_ref[...]     # (1, 1)

    def body(ci, carry):
        off = pl.multiple_of(ci * chunk, chunk)
        sl = pl.ds(off, chunk)

        # Single f32 cast per chunk; reused for the FMAs and the final gating.
        gc = g_ref[:, sl].astype(jnp.float32)        # (F_l, chunk)
        xf = x_ref[:, sl].astype(jnp.float32)        # (F_g, chunk)

        # a = ReLU(W_g^T g + W_x^T x + b): unrolled rank-1 VPU FMAs. The chunk is
        # only a few vregs wide, so the accumulator stays register-resident (no
        # whole-tile VMEM round trips). Bias folded into the init.
        acc = wg[:, 0:1] * gc[0:1, :] + bgx          # (F_int, chunk)
        for c in range(1, f_l):
            acc = acc + wg[:, c:c + 1] * gc[c:c + 1, :]
        for c in range(f_g):
            acc = acc + wx[:, c:c + 1] * xf[c:c + 1, :]
        a = jnp.maximum(acc, 0.0)                    # (F_int, chunk)

        # psi = Sigmoid(W_psi^T a + b_psi): VPU mul + XLU sublane reduce; exp and
        # approx reciprocal both ride the otherwise-idle EUP slot.
        z = jnp.sum(a * wpsi, axis=0, keepdims=True) + bpsi
        psi = pl.reciprocal(1.0 + jnp.exp(-z), approx=True)   # (1, chunk)

        # out = x * psi (broadcast over channels); lane-dense, aligned store.
        out_ref[:, sl] = (xf * psi).astype(out_ref.dtype)
        return carry

    jax.lax.fori_loop(0, n_chunks, body, 0)


def _choose_tile_s(S, N, itemsize, F_l, F_g):
    """Spatial tile width: as large as useful, VMEM-budgeted, multiple of 128."""
    # Bytes per spatial column streamed through VMEM (g + x in, out), double-buffered.
    per_col = 2 * (F_l + 2 * F_g) * itemsize
    cap = max(_LANE, (_VMEM_STREAM_BUDGET // per_col) // _LANE * _LANE)
    cap = min(cap, _TILE_S_MAX)
    n_tiles = _cdiv(S, cap)
    # Keep a handful of grid steps alive so both v7x TensorCores (and the DMA
    # pipeline) have work even when the batch count is small.
    min_tiles = min(max(1, _cdiv(8, max(N, 1))), _cdiv(S, _LANE))
    n_tiles = max(n_tiles, min_tiles)
    tile_s = _round_up(_cdiv(S, n_tiles), _LANE)
    return min(tile_s, _round_up(S, _LANE))


def attention_block3d_pallas(g3, x3, wg, bg, wx, bx, wpsi, bpsi):
    """g3: [N, F_l, S], x3: [N, F_g, S] (channels-first). Returns [N, F_g, S]."""
    N, F_l, S = g3.shape
    _, F_g, _ = x3.shape
    F_int = wg.shape[1]

    itemsize = jnp.dtype(x3.dtype).itemsize
    tile_s = _choose_tile_s(S, N, itemsize, F_l, F_g)
    chunk = 512 if tile_s % 512 == 0 else (256 if tile_s % 256 == 0 else 128)

    # Kernel-friendly weight layouts (tiny, fp32, output channels along sublanes).
    wg_k = wg.T.astype(jnp.float32)                          # (F_int, F_l)
    wx_k = wx.T.astype(jnp.float32)                          # (F_int, F_g)
    bgx_k = (bg + bx).reshape(F_int, 1).astype(jnp.float32)  # (F_int, 1)
    wpsi_k = wpsi.reshape(F_int, 1).astype(jnp.float32)      # (F_int, 1)
    bpsi_k = bpsi.reshape(1, 1).astype(jnp.float32)          # (1, 1)

    # Ragged S is handled in-kernel: uneven grid; the last spatial block is partial
    # (OOB input columns are unused garbage, OOB output columns are clipped by the
    # pipeline's bounds-aware writeback). No host-side pad, no output slice.
    grid = (N, _cdiv(S, tile_s))

    vmem_need = 2 * (F_l + 2 * F_g) * itemsize * tile_s + (2 << 20)
    vmem_limit = int(min(48 << 20, max(32 << 20, vmem_need)))   # <= 48 MiB: safe on v7x

    cost = pl.CostEstimate(
        flops=int(2 * N * S * (F_int * (F_l + F_g + 1) + F_g)),
        transcendentals=int(N * S),
        bytes_accessed=int(N * S * (F_l + 2 * F_g) * itemsize),
    )

    out = pl.pallas_call(
        functools.partial(_attention_kernel, chunk=chunk),
        out_shape=jax.ShapeDtypeStruct((N, F_g, S), x3.dtype),
        grid_spec=pltpu.PrefetchScalarGridSpec(
            num_scalar_prefetch=0,
            grid=grid,
            in_specs=[
                pl.BlockSpec((None, F_l, tile_s), lambda n, s: (n, 0, s)),   # g tile
                pl.BlockSpec((None, F_g, tile_s), lambda n, s: (n, 0, s)),   # x tile
                pl.BlockSpec((F_int, F_l), lambda n, s: (0, 0)),             # W_g
                pl.BlockSpec((F_int, F_g), lambda n, s: (0, 0)),             # W_x
                pl.BlockSpec((F_int, 1), lambda n, s: (0, 0)),               # b_g + b_x
                pl.BlockSpec((F_int, 1), lambda n, s: (0, 0)),               # W_psi
                pl.BlockSpec((1, 1), lambda n, s: (0, 0)),                   # b_psi
            ],
            out_specs=pl.BlockSpec((None, F_g, tile_s), lambda n, s: (n, 0, s)),
        ),
        compiler_params=pltpu.CompilerParams(
            dimension_semantics=("parallel", "parallel"),
            vmem_limit_bytes=vmem_limit,
        ),
        cost_estimate=cost,
    )(g3, x3, wg_k, wx_k, bgx_k, wpsi_k, bpsi_k)

    return out


def _fold_conv_bn(w, b, gamma, beta, mean, var, eps=1e-5):
    """Fold 1x1x1 Conv (w: [Cin, Cout], b: [Cout]) with eval-mode BatchNorm."""
    scale = gamma / jnp.sqrt(var + eps)             # [Cout]
    w_f = w * scale[None, :]                        # scale each output channel
    b_f = (b - mean) * scale + beta
    return w_f, b_f


def attention_block3d(g, x, params):
    """g: [N, F_l, D, H, W], x: [N, F_g, D, H, W] (NCDHW, like PyTorch)."""
    N, F_l, D, H, W = g.shape
    _, F_g, _, _, _ = x.shape
    S = D * H * W

    wg, bg = _fold_conv_bn(params["wg"], params["bg"], params["gn_g_gamma"],
                           params["gn_g_beta"], params["gn_g_mean"], params["gn_g_var"])
    wx, bx = _fold_conv_bn(params["wx"], params["bx"], params["gn_x_gamma"],
                           params["gn_x_beta"], params["gn_x_mean"], params["gn_x_var"])
    wpsi, bpsi = _fold_conv_bn(params["wpsi"], params["bpsi"], params["gn_p_gamma"],
                               params["gn_p_beta"], params["gn_p_mean"], params["gn_p_var"])

    # Channels-first, spatial-flattened views: free reshapes, NO transposes.
    g3 = g.reshape(N, F_l, S)
    x3 = x.reshape(N, F_g, S)

    out3 = attention_block3d_pallas(g3, x3, wg, bg, wx, bx, wpsi, bpsi)
    return out3.reshape(N, F_g, D, H, W)


def _reference(g, x, params):
    """Pure-JAX reference mirroring the PyTorch forward (eval-mode BN)."""
    def conv_bn(t, w, b, gamma, beta, mean, var, eps=1e-5):
        # t: NCDHW, w: [Cin, Cout]
        y = jnp.einsum("ncdhw,co->nodhw", t, w) + b[None, :, None, None, None]
        inv = gamma / jnp.sqrt(var + eps)
        return (y - mean[None, :, None, None, None]) * inv[None, :, None, None, None] \
               + beta[None, :, None, None, None]

    g1 = conv_bn(g, params["wg"], params["bg"], params["gn_g_gamma"],
                 params["gn_g_beta"], params["gn_g_mean"], params["gn_g_var"])
    x1 = conv_bn(x, params["wx"], params["bx"], params["gn_x_gamma"],
                 params["gn_x_beta"], params["gn_x_mean"], params["gn_x_var"])
    psi = jnp.maximum(g1 + x1, 0.0)
    psi = conv_bn(psi, params["wpsi"], params["bpsi"], params["gn_p_gamma"],
                  params["gn_p_beta"], params["gn_p_mean"], params["gn_p_var"])
    psi = jax.nn.sigmoid(psi)
    return x * psi


def _make_params(key, F_g, F_l, F_int):
    keys = jax.random.split(key, 10)
    return {
        # W_g: Conv3d(F_l -> F_int, k=1) + BatchNorm3d(F_int)
        "wg": 0.1 * jax.random.normal(keys[0], (F_l, F_int), jnp.float32),
        "bg": 0.1 * jax.random.normal(keys[1], (F_int,), jnp.float32),
        "gn_g_gamma": jnp.ones((F_int,), jnp.float32),
        "gn_g_beta": jnp.zeros((F_int,), jnp.float32),
        "gn_g_mean": 0.05 * jax.random.normal(keys[2], (F_int,), jnp.float32),
        "gn_g_var": jnp.ones((F_int,), jnp.float32) + 0.1 * jax.nn.softplus(
            jax.random.normal(keys[3], (F_int,), jnp.float32)),
        # W_x: Conv3d(F_g -> F_int, k=1) + BatchNorm3d(F_int)
        "wx": 0.1 * jax.random.normal(keys[4], (F_g, F_int), jnp.float32),
        "bx": 0.1 * jax.random.normal(keys[5], (F_int,), jnp.float32),
        "gn_x_gamma": jnp.ones((F_int,), jnp.float32),
        "gn_x_beta": jnp.zeros((F_int,), jnp.float32),
        "gn_x_mean": 0.05 * jax.random.normal(keys[6], (F_int,), jnp.float32),
        "gn_x_var": jnp.ones((F_int,), jnp.float32) + 0.1 * jax.nn.softplus(
            jax.random.normal(keys[7], (F_int,), jnp.float32)),
        # psi: Conv3d(F_int -> 1, k=1) + BatchNorm3d(1) + Sigmoid
        "wpsi": 0.1 * jax.random.normal(keys[8], (F_int, 1), jnp.float32),
        "bpsi": 0.1 * jax.random.normal(keys[9], (1,), jnp.float32),
        "gn_p_gamma": jnp.ones((1,), jnp.float32),
        "gn_p_beta": jnp.zeros((1,), jnp.float32),
        "gn_p_mean": jnp.zeros((1,), jnp.float32),
        "gn_p_var": jnp.ones((1,), jnp.float32),
    }


if __name__ == "__main__":
    N, F_g, F_l, F_int = 2, 4, 4, 8
    key = jax.random.PRNGKey(0)
    kp, kg1, kx1, kg2, kx2, kg3, kx3 = jax.random.split(key, 7)
    params = _make_params(kp, F_g, F_l, F_int)

    # Approx-EUP sigmoid reciprocal => allow ~1e-3 relative deviation vs reference.
    ATOL = RTOL = 5e-3

    def _check(g, x):
        out = jax.block_until_ready(attention_block3d(g, x, params))
        ref = jax.block_until_ready(_reference(g, x, params))
        assert out.shape == x.shape, (out.shape, x.shape)
        assert jnp.allclose(out, ref, atol=ATOL, rtol=RTOL), \
            float(jnp.max(jnp.abs(out - ref)))

    # Test 1: flattened spatial size is a multiple of 128 (evenly tiled grid).
    D, H, W = 4, 8, 8
    _check(jax.random.normal(kg1, (N, F_l, D, H, W), jnp.float32),
           jax.random.normal(kx1, (N, F_g, D, H, W), jnp.float32))

    # Test 2: ragged spatial size (D*H*W = 105 < 128): single partial block.
    D, H, W = 3, 5, 7
    _check(jax.random.normal(kg2, (N, F_l, D, H, W), jnp.float32),
           jax.random.normal(kx2, (N, F_g, D, H, W), jnp.float32))

    # Test 3: ragged multi-tile spatial size (D*H*W = 1020): last tile partial.
    D, H, W = 5, 12, 17
    _check(jax.random.normal(kg3, (N, F_l, D, H, W), jnp.float32),
           jax.random.normal(kx3, (N, F_g, D, H, W), jnp.float32))

    print("KERNEL_OK")
</pallas_src>

<mosaic_0001>
module attributes {stable_mosaic.version = 11 : i64} {
  func.func @_attention_kernel(%arg0: i32, %arg1: i32, %arg2: memref<1x4x128xf32, #tpu.memory_space<vmem>>, %arg3: memref<1x4x128xf32, #tpu.memory_space<vmem>>, %arg4: memref<8x4xf32, #tpu.memory_space<vmem>>, %arg5: memref<8x4xf32, #tpu.memory_space<vmem>>, %arg6: memref<8x1xf32, #tpu.memory_space<vmem>>, %arg7: memref<8x1xf32, #tpu.memory_space<vmem>>, %arg8: memref<1x1xf32, #tpu.memory_space<vmem>>, %arg9: memref<1x4x128xf32, #tpu.memory_space<vmem>>) attributes {dimension_semantics = [#tpu.dimension_semantics<parallel>, #tpu.dimension_semantics<parallel>], iteration_bounds = array<i64: 2, 2>, scalar_prefetch = 0 : i64, scratch_operands = 0 : i64, tpu.core_type = #tpu.core_type<tc>, window_params = [{transform_indices = @transform_0, window_bounds = array<i64: 1, 4, 128>}, {transform_indices = @transform_1, window_bounds = array<i64: 1, 4, 128>}, {pipeline_mode = #tpu.pipeline_mode<synchronous>, transform_indices = @transform_2, window_bounds = array<i64: 8, 4>}, {pipeline_mode = #tpu.pipeline_mode<synchronous>, transform_indices = @transform_3, window_bounds = array<i64: 8, 4>}, {pipeline_mode = #tpu.pipeline_mode<synchronous>, transform_indices = @transform_4, window_bounds = array<i64: 8, 1>}, {pipeline_mode = #tpu.pipeline_mode<synchronous>, transform_indices = @transform_5, window_bounds = array<i64: 8, 1>}, {pipeline_mode = #tpu.pipeline_mode<synchronous>, transform_indices = @transform_6, window_bounds = array<i64: 1, 1>}, {transform_indices = @transform_7, window_bounds = array<i64: 1, 4, 128>}]} {
    %c0 = arith.constant 0 : index
    %c0_0 = arith.constant 0 : index
    %0 = vector.load %arg4[%c0, %c0_0] : memref<8x4xf32, #tpu.memory_space<vmem>>, vector<8x4xf32>
    %c0_1 = arith.constant 0 : index
    %c0_2 = arith.constant 0 : index
    %1 = vector.load %arg5[%c0_1, %c0_2] : memref<8x4xf32, #tpu.memory_space<vmem>>, vector<8x4xf32>
    %c0_3 = arith.constant 0 : index
    %c0_4 = arith.constant 0 : index
    %2 = vector.load %arg6[%c0_3, %c0_4] : memref<8x1xf32, #tpu.memory_space<vmem>>, vector<8x1xf32>
    %c0_5 = arith.constant 0 : index
    %c0_6 = arith.constant 0 : index
    %3 = vector.load %arg7[%c0_5, %c0_6] : memref<8x1xf32, #tpu.memory_space<vmem>>, vector<8x1xf32>
    %c0_7 = arith.constant 0 : index
    %c0_8 = arith.constant 0 : index
    %4 = vector.load %arg8[%c0_7, %c0_8] : memref<1x1xf32, #tpu.memory_space<vmem>>, vector<1x1xf32>
    %c0_i32 = arith.constant 0 : i32
    %c128_i32 = arith.constant 128 : i32
    %5 = arith.muli %c0_i32, %c128_i32 : i32
    %6 = tpu.assume_multiple %5, 128 : i32
    %c0_9 = arith.constant 0 : index
    %c0_10 = arith.constant 0 : index
    %7 = arith.index_cast %6 : i32 to index
    %8 = vector.load %arg2[%c0_9, %c0_10, %7] : memref<1x4x128xf32, #tpu.memory_space<vmem>>, vector<1x4x128xf32>
    %9 = vector.shape_cast %8 : vector<1x4x128xf32> to vector<4x128xf32>
    %c0_11 = arith.constant 0 : index
    %c0_12 = arith.constant 0 : index
    %10 = arith.index_cast %6 : i32 to index
    %11 = vector.load %arg3[%c0_11, %c0_12, %10] : memref<1x4x128xf32, #tpu.memory_space<vmem>>, vector<1x4x128xf32>
    %12 = vector.shape_cast %11 : vector<1x4x128xf32> to vector<4x128xf32>
    %13 = vector.extract_strided_slice %0 {offsets = [0, 0], sizes = [8, 1], strides = [1, 1]} : vector<8x4xf32> to vector<8x1xf32>
    %14 = vector.extract_strided_slice %9 {offsets = [0, 0], sizes = [1, 128], strides = [1, 1]} : vector<4x128xf32> to vector<1x128xf32>
    %15 = vector.broadcast %13 : vector<8x1xf32> to vector<8x128xf32>
    %16 = vector.broadcast %14 : vector<1x128xf32> to vector<8x128xf32>
    %17 = arith.mulf %15, %16 : vector<8x128xf32>
    %18 = vector.broadcast %2 : vector<8x1xf32> to vector<8x128xf32>
    %19 = arith.addf %17, %18 : vector<8x128xf32>
    %20 = vector.extract_strided_slice %0 {offsets = [0, 1], sizes = [8, 1], strides = [1, 1]} : vector<8x4xf32> to vector<8x1xf32>
    %21 = vector.extract_strided_slice %9 {offsets = [1, 0], sizes = [1, 128], strides = [1, 1]} : vector<4x128xf32> to vector<1x128xf32>
    %22 = vector.broadcast %20 : vector<8x1xf32> to vector<8x128xf32>
    %23 = vector.broadcast %21 : vector<1x128xf32> to vector<8x128xf32>
    %24 = arith.mulf %22, %23 : vector<8x128xf32>
    %25 = arith.addf %19, %24 : vector<8x128xf32>
    %26 = vector.extract_strided_slice %0 {offsets = [0, 2], sizes = [8, 1], strides = [1, 1]} : vector<8x4xf32> to vector<8x1xf32>
    %27 = vector.extract_strided_slice %9 {offsets = [2, 0], sizes = [1, 128], strides = [1, 1]} : vector<4x128xf32> to vector<1x128xf32>
    %28 = vector.broadcast %26 : vector<8x1xf32> to vector<8x128xf32>
    %29 = vector.broadcast %27 : vector<1x128xf32> to vector<8x128xf32>
    %30 = arith.mulf %28, %29 : vector<8x128xf32>
    %31 = arith.addf %25, %30 : vector<8x128xf32>
    %32 = vector.extract_strided_slice %0 {offsets = [0, 3], sizes = [8, 1], strides = [1, 1]} : vector<8x4xf32> to vector<8x1xf32>
    %33 = vector.extract_strided_slice %9 {offsets = [3, 0], sizes = [1, 128], strides = [1, 1]} : vector<4x128xf32> to vector<1x128xf32>
    %34 = vector.broadcast %32 : vector<8x1xf32> to vector<8x128xf32>
    %35 = vector.broadcast %33 : vector<1x128xf32> to vector<8x128xf32>
    %36 = arith.mulf %34, %35 : vector<8x128xf32>
    %37 = arith.addf %31, %36 : vector<8x128xf32>
    %38 = vector.extract_strided_slice %1 {offsets = [0, 0], sizes = [8, 1], strides = [1, 1]} : vector<8x4xf32> to vector<8x1xf32>
    %39 = vector.extract_strided_slice %12 {offsets = [0, 0], sizes = [1, 128], strides = [1, 1]} : vector<4x128xf32> to vector<1x128xf32>
    %40 = vector.broadcast %38 : vector<8x1xf32> to vector<8x128xf32>
    %41 = vector.broadcast %39 : vector<1x128xf32> to vector<8x128xf32>
    %42 = arith.mulf %40, %41 : vector<8x128xf32>
    %43 = arith.addf %37, %42 : vector<8x128xf32>
    %44 = vector.extract_strided_slice %1 {offsets = [0, 1], sizes = [8, 1], strides = [1, 1]} : vector<8x4xf32> to vector<8x1xf32>
    %45 = vector.extract_strided_slice %12 {offsets = [1, 0], sizes = [1, 128], strides = [1, 1]} : vector<4x128xf32> to vector<1x128xf32>
    %46 = vector.broadcast %44 : vector<8x1xf32> to vector<8x128xf32>
    %47 = vector.broadcast %45 : vector<1x128xf32> to vector<8x128xf32>
    %48 = arith.mulf %46, %47 : vector<8x128xf32>
    %49 = arith.addf %43, %48 : vector<8x128xf32>
    %50 = vector.extract_strided_slice %1 {offsets = [0, 2], sizes = [8, 1], strides = [1, 1]} : vector<8x4xf32> to vector<8x1xf32>
    %51 = vector.extract_strided_slice %12 {offsets = [2, 0], sizes = [1, 128], strides = [1, 1]} : vector<4x128xf32> to vector<1x128xf32>
    %52 = vector.broadcast %50 : vector<8x1xf32> to vector<8x128xf32>
    %53 = vector.broadcast %51 : vector<1x128xf32> to vector<8x128xf32>
    %54 = arith.mulf %52, %53 : vector<8x128xf32>
    %55 = arith.addf %49, %54 : vector<8x128xf32>
    %56 = vector.extract_strided_slice %1 {offsets = [0, 3], sizes = [8, 1], strides = [1, 1]} : vector<8x4xf32> to vector<8x1xf32>
    %57 = vector.extract_strided_slice %12 {offsets = [3, 0], sizes = [1, 128], strides = [1, 1]} : vector<4x128xf32> to vector<1x128xf32>
    %58 = vector.broadcast %56 : vector<8x1xf32> to vector<8x128xf32>
    %59 = vector.broadcast %57 : vector<1x128xf32> to vector<8x128xf32>
    %60 = arith.mulf %58, %59 : vector<8x128xf32>
    %61 = arith.addf %55, %60 : vector<8x128xf32>
    %cst = arith.constant 0.000000e+00 : f32
    %62 = vector.broadcast %cst : f32 to vector<8x128xf32>
    %63 = arith.maximumf %61, %62 : vector<8x128xf32>
    %64 = vector.broadcast %3 : vector<8x1xf32> to vector<8x128xf32>
    %65 = arith.mulf %63, %64 : vector<8x128xf32>
    %cst_13 = arith.constant dense<0.000000e+00> : vector<128xf32>
    %66 = vector.multi_reduction <add>, %65, %cst_13 [0] : vector<8x128xf32> to vector<128xf32>
    %67 = vector.shape_cast %66 : vector<128xf32> to vector<1x128xf32>
    %68 = vector.broadcast %4 : vector<1x1xf32> to vector<1x128xf32>
    %69 = arith.addf %67, %68 : vector<1x128xf32>
    %cst_14 = arith.constant 0.000000e+00 : f32
    %70 = vector.broadcast %cst_14 : f32 to vector<1x128xf32>
    %71 = arith.subf %70, %69 : vector<1x128xf32>
    %72 = math.exp %71 : vector<1x128xf32>
    %cst_15 = arith.constant 1.000000e+00 : f32
    %73 = vector.broadcast %cst_15 : f32 to vector<1x128xf32>
    %74 = arith.addf %73, %72 : vector<1x128xf32>
    %75 = tpu.reciprocal %74 {approx = true} : vector<1x128xf32> -> vector<1x128xf32>
    %76 = vector.broadcast %75 : vector<1x128xf32> to vector<4x128xf32>
    %77 = arith.mulf %12, %76 : vector<4x128xf32>
    %c0_16 = arith.constant 0 : index
    %c0_17 = arith.constant 0 : index
    %78 = arith.index_cast %6 : i32 to index
    %79 = vector.load %arg9[%c0_16, %c0_17, %78] : memref<1x4x128xf32, #tpu.memory_space<vmem>>, vector<1x4x128xf32>
    %80 = vector.shape_cast %79 : vector<1x4x128xf32> to vector<4x128xf32>
    %81 = vector.shape_cast %77 : vector<4x128xf32> to vector<1x4x128xf32>
    tpu.vector_store %arg9[%c0_16, %c0_17, %78], %81 {strides = array<i32>} : memref<1x4x128xf32, #tpu.memory_space<vmem>>, vector<1x4x128xf32>,
    %c1_i32 = arith.constant 1 : i32
    return
  }
  func.func @transform_0(%arg0: i32, %arg1: i32) -> (i32, i32, i32) {
    %c0_i32 = arith.constant 0 : i32
    %c0_i32_0 = arith.constant 0 : i32
    return %arg0, %c0_i32, %arg1 : i32, i32, i32
  }
  func.func @transform_1(%arg0: i32, %arg1: i32) -> (i32, i32, i32) {
    %c0_i32 = arith.constant 0 : i32
    %c0_i32_0 = arith.constant 0 : i32
    return %arg0, %c0_i32, %arg1 : i32, i32, i32
  }
  func.func @transform_2(%arg0: i32, %arg1: i32) -> (i32, i32) {
    %c0_i32 = arith.constant 0 : i32
    %c0_i32_0 = arith.constant 0 : i32
    %c0_i32_1 = arith.constant 0 : i32
    return %c0_i32, %c0_i32_0 : i32, i32
  }
  func.func @transform_3(%arg0: i32, %arg1: i32) -> (i32, i32) {
    %c0_i32 = arith.constant 0 : i32
    %c0_i32_0 = arith.constant 0 : i32
    %c0_i32_1 = arith.constant 0 : i32
    return %c0_i32, %c0_i32_0 : i32, i32
  }
  func.func @transform_4(%arg0: i32, %arg1: i32) -> (i32, i32) {
    %c0_i32 = arith.constant 0 : i32
    %c0_i32_0 = arith.constant 0 : i32
    %c0_i32_1 = arith.constant 0 : i32
    return %c0_i32, %c0_i32_0 : i32, i32
  }
  func.func @transform_5(%arg0: i32, %arg1: i32) -> (i32, i32) {
    %c0_i32 = arith.constant 0 : i32
    %c0_i32_0 = arith.constant 0 : i32
    %c0_i32_1 = arith.constant 0 : i32
    return %c0_i32, %c0_i32_0 : i32, i32
  }
  func.func @transform_6(%arg0: i32, %arg1: i32) -> (i32, i32) {
    %c0_i32 = arith.constant 0 : i32
    %c0_i32_0 = arith.constant 0 : i32
    %c0_i32_1 = arith.constant 0 : i32
    return %c0_i32, %c0_i32_0 : i32, i32
  }
  func.func @transform_7(%arg0: i32, %arg1: i32) -> (i32, i32, i32) {
    %c0_i32 = arith.constant 0 : i32
    %c0_i32_0 = arith.constant 0 : i32
    return %arg0, %c0_i32, %arg1 : i32, i32, i32
  }
}

</mosaic_0001>

<llo_original>
// kernel: tpu_custom_call.1
$region0: #{tpu_custom_call.1}
  #allocation0 [shape = 'u32[]', space=smem, size = 0x4, offset = 0x4, fixed_abs, tag = 'smem constant byte address 0x4 - core index']
  #allocation1 [shape = 'u32[144,128]{1,0:T(1,128)}', space=vmem, size = 0x12000, scoped, tag = 'internal scratch']
  #allocation2 [shape = 'f32[1,1]{1,0:T(1,128)S(1)}', space=vmem, size = 0x200, scoped, tag = 'scoped memory for tpu_custom_call.1']
  %s0 = inlined_call_operand.vmem [shape: f32[2,4,256], index: 0, kind: input, shape index: {}]
  %s1 = inlined_call_operand.vmem [shape: f32[2,4,256], index: 1, kind: input, shape index: {}]
  %s2 = inlined_call_operand.vmem [shape: f32[8,4], index: 2, kind: input, shape index: {}]
  %s3 = inlined_call_operand.vmem [shape: f32[8,4], index: 3, kind: input, shape index: {}]
  %s4 = inlined_call_operand.vmem [shape: f32[8,1], index: 4, kind: input, shape index: {}]
  %s5 = inlined_call_operand.vmem [shape: f32[8,1], index: 5, kind: input, shape index: {}]
  %s6 = inlined_call_operand.<no memory space> [shape: f32[1,1], index: 6, kind: input, shape index: {}]
  %s7 = inlined_call_operand.hbm [shape: f32[2,4,256], index: 7, kind: output, shape index: {}]
  %s8 = sld [smem:[#allocation0]]
  $region61: #{tpu_custom_call.1} parent=0
    _
  %s10 = ssub.s32 1, %s8
  %s11 = scalar_select 0, %s10, %s8
  %v12 = vstv %s6
  %13 = vst [vmem:[#allocation2] sm:$0x1] %v12
  $region1: #{tpu_custom_call.1} parent=0
    #allocation3 [shape = 'u8[4096]{0}', space=vmem, size = 0x1000, scoped, tag = 'output window, operand 0']
    #allocation4 [shape = 's32[2]{0}', space=sflag, size = 0x8, scoped, tag = 'scoped memory for tpu_custom_call.1']
    %14 = vsyncpa [#allocation4], 0
    %s15 = scalar_lea.sflag [#allocation4], 1
    %16 = vsyncpa %s15, 0
    loop: start=0, step=1, limit=6
    $region2: #{tpu_custom_call.1} parent=1 // loop_pre_header
      _
    $region3: #{tpu_custom_call.1} parent=1 // loop_header
      %s18 = sphi 0, %s22
      %p19 = scmp.ge.s32.totalorder %s18, 6
      %s25 = sphi 0, %s37
      %s26 = sphi 0, %s33
      %s27 = sphi 0, %s25
      %s28 = sphi 0, %s26
      %s29 = sphi 0, %s27
      %s30 = sphi 0, %s28
      %s42 = sphi 0, %s44
      %s45 = sphi 0, %s42
      %s46 = sphi 0, %s45
      %s62 = sphi 0, %s46
      %s70 = sphi 0, %s72
      %s73 = sphi 0, %s70
      %s74 = sphi 0, %s73
      %s90 = sphi 0, %s74
      %s94 = sphi 0, %s94
      %s96 = sphi 0, %s94
      %s97 = sphi 0, %s96
      %s111 = sphi 0, %s97
      %s115 = sphi 0, %s115
      %s117 = sphi 0, %s115
      %s118 = sphi 0, %s117
      %s132 = sphi 0, %s118
      %s136 = sphi 0, %s136
      %s138 = sphi 0, %s136
      %s139 = sphi 0, %s138
      %s153 = sphi 0, %s139
      %s157 = sphi 0, %s157
      %s159 = sphi 0, %s157
      %s160 = sphi 0, %s159
      %s174 = sphi 0, %s160
      %s178 = sphi 0, %s178
      %s180 = sphi 0, %s178
      %s181 = sphi 0, %s180
      %s195 = sphi 0, %s181
      %s203 = sphi 0, %s205
      %s206 = sphi 0, %s203
      %s207 = sphi 0, %s206
      %s223 = sphi 0, %s207
    $region4: #{tpu_custom_call.1} parent=1 // loop_header_branch
      %21 = sbr.rel (%p19) target = $region8
    $region5: #{tpu_custom_call.1} parent=1 // loop_body
      %s23 = ssub.s32 %s18, 1
      %s24 = ssub.s32 %s18, 2
      %s31 = sadd.s32 1, %s26
      %p32 = scmp.ge.s32.totalorder %s31, 2
      %s33 = scalar_select %p32, 0, %s31
      %s34 = sadd.s32 1, %s25
      %s35 = scalar_select %p32, %s34, %s25
      %p36 = scmp.ge.s32.totalorder %s35, 2
      %s37 = scalar_select %p36, 0, %s35
      %s38 = ssub.s32 %s25, %s37
      %s39 = ssub.s32 %s26, %s33
      %s40 = sor.u32 %s38, %s39
      %p41 = scmp.eq.s32.totalorder %s40, 0
      %s43 = sadd.s32 %s42, 1
      %s44 = scalar_select %p41, %s42, %s43
      %p47 = pneg %p41
      %p48 = scmp.eq.s32.totalorder %s18, 3
      %p49 = por %p47, %p48
      %p50 = scmp.ne.s32.totalorder %s42, %s45
      %p51 = scmp.eq.s32.totalorder %s18, 0
      %p52 = por %p50, %p51
      %p53 = scmp.ne.s32.totalorder %s42, %s45
      %p54 = scmp.eq.s32.totalorder %s23, 3
      %p55 = por %p53, %p54
      %p56 = scmp.ne.s32.totalorder %s45, %s46
      %p57 = scmp.eq.s32.totalorder %s23, 0
      %p58 = por %p56, %p57
      %p59 = scmp.ne.s32.totalorder %s45, %s46
      %p60 = scmp.eq.s32.totalorder %s24, 3
      %p61 = por %p59, %p60
      %p63 = scmp.ne.s32.totalorder %s46, %s62
      %p64 = scmp.eq.s32.totalorder %s24, 0
      %p65 = por %p63, %p64
      %s66 = ssub.s32 %s25, %s37
      %s67 = ssub.s32 %s26, %s33
      %s68 = sor.u32 %s66, %s67
      %p69 = scmp.eq.s32.totalorder %s68, 0
      %s71 = sadd.s32 %s70, 1
      %s72 = scalar_select %p69, %s70, %s71
      %p75 = pneg %p69
      %p76 = scmp.eq.s32.totalorder %s18, 3
      %p77 = por %p75, %p76
      %p78 = scmp.ne.s32.totalorder %s70, %s73
      %p79 = scmp.eq.s32.totalorder %s18, 0
      %p80 = por %p78, %p79
      %p81 = scmp.ne.s32.totalorder %s70, %s73
      %p82 = scmp.eq.s32.totalorder %s23, 3
      %p83 = por %p81, %p82
      %p84 = scmp.ne.s32.totalorder %s73, %s74
      %p85 = scmp.eq.s32.totalorder %s23, 0
      %p86 = por %p84, %p85
      %p87 = scmp.ne.s32.totalorder %s73, %s74
      %p88 = scmp.eq.s32.totalorder %s24, 3
      %p89 = por %p87, %p88
      %p91 = scmp.ne.s32.totalorder %s74, %s90
      %p92 = scmp.eq.s32.totalorder %s24, 0
      %p93 = por %p91, %p92
      %s95 = sadd.s32 %s94, 1
      %p98 = scmp.eq.s32.totalorder %s18, 3
      %p99 = scmp.ne.s32.totalorder %s94, %s96
      %p100 = scmp.eq.s32.totalorder %s18, 0
      %p101 = por %p99, %p100
      %p102 = scmp.ne.s32.totalorder %s94, %s96
      %p103 = scmp.eq.s32.totalorder %s23, 3
      %p104 = por %p102, %p103
      %p105 = scmp.ne.s32.totalorder %s96, %s97
      %p106 = scmp.eq.s32.totalorder %s23, 0
      %p107 = por %p105, %p106
      %p108 = scmp.ne.s32.totalorder %s96, %s97
      %p109 = scmp.eq.s32.totalorder %s24, 3
      %p110 = por %p108, %p109
      %p112 = scmp.ne.s32.totalorder %s97, %s111
      %p113 = scmp.eq.s32.totalorder %s24, 0
      %p114 = por %p112, %p113
      %s116 = sadd.s32 %s115, 1
      %p119 = scmp.eq.s32.totalorder %s18, 3
      %p120 = scmp.ne.s32.totalorder %s115, %s117
      %p121 = scmp.eq.s32.totalorder %s18, 0
      %p122 = por %p120, %p121
      %p123 = scmp.ne.s32.totalorder %s115, %s117
      %p124 = scmp.eq.s32.totalorder %s23, 3
      %p125 = por %p123, %p124
      %p126 = scmp.ne.s32.totalorder %s117, %s118
      %p127 = scmp.eq.s32.totalorder %s23, 0
      %p128 = por %p126, %p127
      %p129 = scmp.ne.s32.totalorder %s117, %s118
      %p130 = scmp.eq.s32.totalorder %s24, 3
      %p131 = por %p129, %p130
      %p133 = scmp.ne.s32.totalorder %s118, %s132
      %p134 = scmp.eq.s32.totalorder %s24, 0
      %p135 = por %p133, %p134
      %s137 = sadd.s32 %s136, 1
      %p140 = scmp.eq.s32.totalorder %s18, 3
      %p141 = scmp.ne.s32.totalorder %s136, %s138
      %p142 = scmp.eq.s32.totalorder %s18, 0
      %p143 = por %p141, %p142
      %p144 = scmp.ne.s32.totalorder %s136, %s138
      %p145 = scmp.eq.s32.totalorder %s23, 3
      %p146 = por %p144, %p145
      %p147 = scmp.ne.s32.totalorder %s138, %s139
      %p148 = scmp.eq.s32.totalorder %s23, 0
      %p149 = por %p147, %p148
      %p150 = scmp.ne.s32.totalorder %s138, %s139
      %p151 = scmp.eq.s32.totalorder %s24, 3
      %p152 = por %p150, %p151
      %p154 = scmp.ne.s32.totalorder %s139, %s153
      %p155 = scmp.eq.s32.totalorder %s24, 0
      %p156 = por %p154, %p155
      %s158 = sadd.s32 %s157, 1
      %p161 = scmp.eq.s32.totalorder %s18, 3
      %p162 = scmp.ne.s32.totalorder %s157, %s159
      %p163 = scmp.eq.s32.totalorder %s18, 0
      %p164 = por %p162, %p163
      %p165 = scmp.ne.s32.totalorder %s157, %s159
      %p166 = scmp.eq.s32.totalorder %s23, 3
      %p167 = por %p165, %p166
      %p168 = scmp.ne.s32.totalorder %s159, %s160
      %p169 = scmp.eq.s32.totalorder %s23, 0
      %p170 = por %p168, %p169
      %p171 = scmp.ne.s32.totalorder %s159, %s160
      %p172 = scmp.eq.s32.totalorder %s24, 3
      %p173 = por %p171, %p172
      %p175 = scmp.ne.s32.totalorder %s160, %s174
      %p176 = scmp.eq.s32.totalorder %s24, 0
      %p177 = por %p175, %p176
      %s179 = sadd.s32 %s178, 1
      %p182 = scmp.eq.s32.totalorder %s18, 3
      %p183 = scmp.ne.s32.totalorder %s178, %s180
      %p184 = scmp.eq.s32.totalorder %s18, 0
      %p185 = por %p183, %p184
      %p186 = scmp.ne.s32.totalorder %s178, %s180
      %p187 = scmp.eq.s32.totalorder %s23, 3
      %p188 = por %p186, %p187
      %p189 = scmp.ne.s32.totalorder %s180, %s181
      %p190 = scmp.eq.s32.totalorder %s23, 0
      %p191 = por %p189, %p190
      %p192 = scmp.ne.s32.totalorder %s180, %s181
      %p193 = scmp.eq.s32.totalorder %s24, 3
      %p194 = por %p192, %p193
      %p196 = scmp.ne.s32.totalorder %s181, %s195
      %p197 = scmp.eq.s32.totalorder %s24, 0
      %p198 = por %p196, %p197
      %s199 = ssub.s32 %s25, %s37
      %s200 = ssub.s32 %s26, %s33
      %s201 = sor.u32 %s199, %s200
      %p202 = scmp.eq.s32.totalorder %s201, 0
      %s204 = sadd.s32 %s203, 1
      %s205 = scalar_select %p202, %s203, %s204
      %p208 = pneg %p202
      %p209 = scmp.eq.s32.totalorder %s18, 3
      %p210 = por %p208, %p209
      %p211 = scmp.ne.s32.totalorder %s203, %s206
      %p212 = scmp.eq.s32.totalorder %s18, 0
      %p213 = por %p211, %p212
      %p214 = scmp.ne.s32.totalorder %s203, %s206
      %p215 = scmp.eq.s32.totalorder %s23, 3
      %p216 = por %p214, %p215
      %p217 = scmp.ne.s32.totalorder %s206, %s207
      %p218 = scmp.eq.s32.totalorder %s23, 0
      %p219 = por %p217, %p218
      %p220 = scmp.ne.s32.totalorder %s206, %s207
      %p221 = scmp.eq.s32.totalorder %s24, 3
      %p222 = por %p220, %p221
      %p224 = scmp.ne.s32.totalorder %s207, %s223
      %p225 = scmp.eq.s32.totalorder %s24, 0
      %p226 = por %p224, %p225
      %p227 = scmp.le.s32.totalorder 1, %s18
      %p228 = scmp.lt.s32.totalorder %s18, 5
      %p229 = pnand %p227, %p228
      %p230 = pneg %p229
      // Predicated region
      $region9: #{tpu_custom_call.1} parent=5 // pred_check
        _
      $region10: #{tpu_custom_call.1} parent=5 // pred_check_branch
        %232 = sbr.rel (%p229) target = $region12
      $region11: #{tpu_custom_call.1} parent=5 // pred_region
        %s233 = ssub.s32 %s18, 1
        // Predicated region
        $region13: #{tpu_custom_call.1} parent=11 // pred_check
          %p234 = pneg %p107
        $region14: #{tpu_custom_call.1} parent=11 // pred_check_branch
          %236 = sbr.rel (%p234) target = $region16
        $region15: #{tpu_custom_call.1} parent=11 // pred_region
          _
        $region16: #{tpu_custom_call.1} parent=11 // pred_fallthru
          _
        // Predicated region
        $region17: #{tpu_custom_call.1} parent=11 // pred_check
          %p237 = pneg %p128
        $region18: #{tpu_custom_call.1} parent=11 // pred_check_branch
          %239 = sbr.rel (%p237) target = $region20
        $region19: #{tpu_custom_call.1} parent=11 // pred_region
          _
        $region20: #{tpu_custom_call.1} parent=11 // pred_fallthru
          _
        // Predicated region
        $region21: #{tpu_custom_call.1} parent=11 // pred_check
          %p240 = pneg %p149
        $region22: #{tpu_custom_call.1} parent=11 // pred_check_branch
          %242 = sbr.rel (%p240) target = $region24
        $region23: #{tpu_custom_call.1} parent=11 // pred_region
          _
        $region24: #{tpu_custom_call.1} parent=11 // pred_fallthru
          _
        // Predicated region
        $region25: #{tpu_custom_call.1} parent=11 // pred_check
          %p243 = pneg %p170
        $region26: #{tpu_custom_call.1} parent=11 // pred_check_branch
          %245 = sbr.rel (%p243) target = $region28
        $region27: #{tpu_custom_call.1} parent=11 // pred_region
          _
        $region28: #{tpu_custom_call.1} parent=11 // pred_fallthru
          _
        // Predicated region
        $region29: #{tpu_custom_call.1} parent=11 // pred_check
          %p246 = pneg %p191
        $region30: #{tpu_custom_call.1} parent=11 // pred_check_branch
          %248 = sbr.rel (%p246) target = $region32
        $region31: #{tpu_custom_call.1} parent=11 // pred_region
          _
        $region32: #{tpu_custom_call.1} parent=11 // pred_fallthru
          _
      $region12: #{tpu_custom_call.1} parent=5 // pred_fallthru
        _
      %p249 = scmp.lt.s32.totalorder %s18, 4
      // Predicated region
      $region33: #{tpu_custom_call.1} parent=5 // pred_check
        %p250 = pneg %p249
      $region34: #{tpu_custom_call.1} parent=5 // pred_check_branch
        %252 = sbr.rel (%p250) target = $region36
      $region35: #{tpu_custom_call.1} parent=5 // pred_region
        // Predicated region
        $region37: #{tpu_custom_call.1} parent=35 // pred_check
          %p253 = pneg %p52
        $region38: #{tpu_custom_call.1} parent=35 // pred_check_branch
          %255 = sbr.rel (%p253) target = $region40
        $region39: #{tpu_custom_call.1} parent=35 // pred_region
          %p256 = scmp.lt.s32.totalorder %s25, 1
          %s257 = scalar_select %p256, %s25, 1
          %p258 = scmp.lt.s32.totalorder %s26, 1
          %s259 = scalar_select %p258, %s26, 1
          %s260 = smul.addr %s257, 2
          %s261 = sadd.s32 %s259, %s260
          %s262 = smul.addr %s261, 4
          %s263 = scalar_lea.vmem %s0, %s262
        $region40: #{tpu_custom_call.1} parent=35 // pred_fallthru
          _
        // Predicated region
        $region41: #{tpu_custom_call.1} parent=35 // pred_check
          %p264 = pneg %p80
        $region42: #{tpu_custom_call.1} parent=35 // pred_check_branch
          %266 = sbr.rel (%p264) target = $region44
        $region43: #{tpu_custom_call.1} parent=35 // pred_region
          %p267 = scmp.lt.s32.totalorder %s25, 1
          %s268 = scalar_select %p267, %s25, 1
          %p269 = scmp.lt.s32.totalorder %s26, 1
          %s270 = scalar_select %p269, %s26, 1
          %s271 = smul.addr %s268, 2
          %s272 = sadd.s32 %s270, %s271
          %s273 = smul.addr %s272, 4
          %s274 = scalar_lea.vmem %s1, %s273
        $region44: #{tpu_custom_call.1} parent=35 // pred_fallthru
          _
      $region36: #{tpu_custom_call.1} parent=5 // pred_fallthru
        _
      %p275 = scmp.le.s32.totalorder 1, %s18
      %p276 = scmp.lt.s32.totalorder %s18, 5
      %p277 = pnand %p275, %p276
      %p278 = pneg %p277
      // Predicated region
      $region45: #{tpu_custom_call.1} parent=5 // pred_check
        _
      $region46: #{tpu_custom_call.1} parent=5 // pred_check_branch
        %280 = sbr.rel (%p277) target = $region48
      $region47: #{tpu_custom_call.1} parent=5 // pred_region
        %s281 = ssub.s32 %s18, 1
        %p282 = scmp.lt.s32.totalorder %s27, 1
        %s283 = scalar_select %p282, %s27, 1
        %p284 = scmp.lt.s32.totalorder %s28, 1
        %s285 = scalar_select %p284, %s28, 1
        %s286 = smul.addr %s283, 2
        %s287 = sadd.s32 %s285, %s286
        %s288 = smul.addr %s287, 4
        %s289 = scalar_lea.vmem %s0, %s288
        %p290 = pneg %p58
        %p291 = pneg %p55
        %p292 = scmp.lt.s32.totalorder %s27, 1
        %s293 = scalar_select %p292, %s27, 1
        %p294 = scmp.lt.s32.totalorder %s28, 1
        %s295 = scalar_select %p294, %s28, 1
        %s296 = smul.addr %s293, 2
        %s297 = sadd.s32 %s295, %s296
        %s298 = smul.addr %s297, 4
        %s299 = scalar_lea.vmem %s1, %s298
        %p300 = pneg %p86
        %p301 = pneg %p83
        %p302 = pneg %p107
        %p303 = pneg %p104
        %p304 = pneg %p128
        %p305 = pneg %p125
        %p306 = pneg %p149
        %p307 = pneg %p146
        %p308 = pneg %p170
        %p309 = pneg %p167
        %p310 = pneg %p191
        %p311 = pneg %p188
        %p312 = pneg %p219
        %p313 = pneg %p216
        %s314 = sand.u32 %s206, 1
        %s315 = scalar_lea.sflag [#allocation4], %s314
        %s316 = sand.u32 %s206, 1
        %s317 = smul.addr %s316, 4
        %s318 = scalar_lea.vmem [#allocation3], %s317
        %p319 = scmp.lt.s32.totalorder %s27, 1
        %s320 = scalar_select %p319, %s27, 1
        %p321 = scmp.lt.s32.totalorder %s28, 1
        %s322 = scalar_select %p321, %s28, 1
        %s323 = smul.addr %s320, 2
        %s324 = sadd.s32 %s322, %s323
        %s325 = smul.addr %s324, 4
        %s326 = scalar_lea.vmem %s0, %s325
        %p327 = scmp.lt.s32.totalorder %s27, 1
        %s328 = scalar_select %p327, %s27, 1
        %p329 = scmp.lt.s32.totalorder %s28, 1
        %s330 = scalar_select %p329, %s28, 1
        %s331 = smul.addr %s328, 2
        %s332 = sadd.s32 %s330, %s331
        %s333 = smul.addr %s332, 4
        %s334 = scalar_lea.vmem %s1, %s333
        %v335 = vld [vmem:[%s2] sm:$0xff]
        %v336 = vld [vmem:[%s3] sm:$0xff]
        %v337 = vld [vmem:[%s4] sm:$0xff]
        %v338 = vld [vmem:[%s5] sm:$0xff]
        %v339 = vld [vmem:[#allocation2] sm:$0x1]
        %v340 = vld [vmem:[%s326] sm:$0xf]
        %v341 = vld [vmem:[%s334] sm:$0xf]
        %343 = vset.pattern.permute.xlu0 0
        %344 = vperm.xlu0 %343, %v335
        %v345 = vpop.permute.xlu0 %344
        %v347 = vlaneseq
        %v348 = vshrl.u32 %v347, 7
        %v349 = vsub.s32 0, %v348
        %v350 = vrot.slane %v340, %v349
        %v351 = vmul.f32 %v345, %v350
        %353 = vset.pattern.permute.xlu0 0
        %354 = vperm.xlu0 %353, %v337
        %v355 = vpop.permute.xlu0 %354
        %v357 = vadd.f32 %v351, %v355
        %358 = vset.pattern.permute.xlu0 1
        %359 = vperm.xlu0 %358, %v335
        %v360 = vpop.permute.xlu0 %359
        %v362 = vlaneseq
        %v363 = vshrl.u32 %v362, 7
        %v364 = vsub.s32 1, %v363
        %v365 = vrot.slane %v340, %v364
        %v366 = vmul.f32 %v360, %v365
        %v367 = vadd.f32 %v357, %v366
        %368 = vset.pattern.permute.xlu0 2
        %369 = vperm.xlu0 %368, %v335
        %v370 = vpop.permute.xlu0 %369
        %v372 = vlaneseq
        %v373 = vshrl.u32 %v372, 7
        %v374 = vsub.s32 2, %v373
        %v375 = vrot.slane %v340, %v374
        %v376 = vmul.f32 %v370, %v375
        %v377 = vadd.f32 %v367, %v376
        %378 = vset.pattern.permute.xlu0 3
        %379 = vperm.xlu0 %378, %v335
        %v380 = vpop.permute.xlu0 %379
        %v382 = vlaneseq
        %v383 = vshrl.u32 %v382, 7
        %v384 = vsub.s32 3, %v383
        %v385 = vrot.slane %v340, %v384
        %v386 = vmul.f32 %v380, %v385
        %v387 = vadd.f32 %v377, %v386
        %389 = vset.pattern.permute.xlu0 0
        %390 = vperm.xlu0 %389, %v336
        %v391 = vpop.permute.xlu0 %390
        %v393 = vlaneseq
        %v394 = vshrl.u32 %v393, 7
        %v395 = vsub.s32 0, %v394
        %v396 = vrot.slane %v341, %v395
        %v397 = vmul.f32 %v391, %v396
        %v398 = vadd.f32 %v387, %v397
        %399 = vset.pattern.permute.xlu0 1
        %400 = vperm.xlu0 %399, %v336
        %v401 = vpop.permute.xlu0 %400
        %v403 = vlaneseq
        %v404 = vshrl.u32 %v403, 7
        %v405 = vsub.s32 1, %v404
        %v406 = vrot.slane %v341, %v405
        %v407 = vmul.f32 %v401, %v406
        %v408 = vadd.f32 %v398, %v407
        %409 = vset.pattern.permute.xlu0 2
        %410 = vperm.xlu0 %409, %v336
        %v411 = vpop.permute.xlu0 %410
        %v413 = vlaneseq
        %v414 = vshrl.u32 %v413, 7
        %v415 = vsub.s32 2, %v414
        %v416 = vrot.slane %v341, %v415
        %v417 = vmul.f32 %v411, %v416
        %v418 = vadd.f32 %v408, %v417
        %419 = vset.pattern.permute.xlu0 3
        %420 = vperm.xlu0 %419, %v336
        %v421 = vpop.permute.xlu0 %420
        %v423 = vlaneseq
        %v424 = vshrl.u32 %v423, 7
        %v425 = vsub.s32 3, %v424
        %v426 = vrot.slane %v341, %v425
        %v427 = vmul.f32 %v421, %v426
        %v428 = vadd.f32 %v418, %v427
        %v429 = vmax.f32 %v428, 0.0
        %431 = vset.pattern.permute.xlu0 0
        %432 = vperm.xlu0 %431, %v338
        %v433 = vpop.permute.xlu0 %432
        %v435 = vmul.f32 %v429, %v433
        %v436 = vrot.slane %v435, 4
        %v437 = vadd.f32 %v435, %v436
        %v438 = vrot.slane %v437, 2
        %v439 = vadd.f32 %v437, %v438
        %v440 = vrot.slane %v439, 1
        %v441 = vadd.f32 %v439, %v440
        %443 = vset.pattern.permute.xlu0 0
        %444 = vperm.xlu0 %443, %v339
        %v445 = vpop.permute.xlu0 %444
        %v447 = vlaneseq
        %v448 = vshrl.u32 %v447, 7
        %v449 = vsub.s32 0, %v448
        %v450 = vrot.slane %v445, %v449
        %v451 = vadd.f32 %v441, %v450
        %v452 = vsub.f32 0.0, %v451
        %v453 = vmul.f32 %v452, 1.442695
        %v454 = vpow.pop %v453
        %v455 = vadd.f32 %v454, 1.0
        %v456 = vrcp.pop %v455
        %v457 = vmul.f32 %v341, %v456
        %458 = vst [vmem:[%s318] sm:$0xf] %v457
        %s459 = sand.u32 %s206, 1
        %s460 = scalar_lea.sflag [#allocation4], %s459
        %s461 = sand.u32 %s206, 1
        %s462 = smul.addr %s461, 4
        %s463 = scalar_lea.vmem [#allocation3], %s462
        // Predicated region
        $region49: #{tpu_custom_call.1} parent=47 // pred_check
          %p464 = pneg %p216
        $region50: #{tpu_custom_call.1} parent=47 // pred_check_branch
          %466 = sbr.rel (%p464) target = $region52
        $region51: #{tpu_custom_call.1} parent=47 // pred_region
          %s468 = ssub.s32 64, 64
          %469 = vsyncadd %s460, %s468
          %s470 = smul.addr %s27, 2
          %s471 = sadd.s32 %s28, %s470
          %s472 = smul.addr %s471, 64
          %s473 = scalar_lea.hbm %s7, %s472
          %s475 = sshll.u32 %s463, 4
          %s476 = int_to_ptr.vmem [resolvable:$true] %s475
          %478 = dma.vmem_to_hbm [thread:$0]  %s476, 64, %s473, %s460
        $region52: #{tpu_custom_call.1} parent=47 // pred_fallthru
          _
      $region48: #{tpu_custom_call.1} parent=5 // pred_fallthru
        _
      %p479 = scmp.le.s32.totalorder 2, %s18
      // Predicated region
      $region53: #{tpu_custom_call.1} parent=5 // pred_check
        %p480 = pneg %p479
      $region54: #{tpu_custom_call.1} parent=5 // pred_check_branch
        %482 = sbr.rel (%p480) target = $region56
      $region55: #{tpu_custom_call.1} parent=5 // pred_region
        %s483 = ssub.s32 %s18, 2
        // Predicated region
        $region57: #{tpu_custom_call.1} parent=55 // pred_check
          %p484 = pneg %p222
        $region58: #{tpu_custom_call.1} parent=55 // pred_check_branch
          %486 = sbr.rel (%p484) target = $region60
        $region59: #{tpu_custom_call.1} parent=55 // pred_region
          %s487 = sand.u32 %s207, 1
          %s488 = scalar_lea.sflag [#allocation4], %s487
          %s489 = sand.u32 %s207, 1
          %s490 = smul.addr %s489, 4
          %s491 = scalar_lea.vmem [#allocation3], %s490
          %492 = dma.done %s488, 64
        $region60: #{tpu_custom_call.1} parent=55 // pred_fallthru
          _
      $region56: #{tpu_custom_call.1} parent=5 // pred_fallthru
        _
    $region6: #{tpu_custom_call.1} parent=1 // loop_footer
      %s22 = sadd.s32 1, %s18
    $region7: #{tpu_custom_call.1} parent=1 // loop_footer_branch
      %17 = sbr.rel target = $region3
    $region8: #{tpu_custom_call.1} parent=1 // loop_exit
      _
    %493 = vsyncpa [#allocation4], 1
    %s494 = scalar_lea.sflag [#allocation4], 1
    %495 = vsyncpa %s494, 1

</llo_original>
